<compile_context>
chip_gen: v5e
topology: v5e:2x2
jax: 0.10.0
libtpu: 0.0.40
codegen_flags: <defaults>
</compile_context>

<pallas_src>
import math
import jax
import jax.numpy as jnp
from jax.experimental import pallas as pl
from jax.experimental.pallas import tpu as pltpu  # noqa: F401  (imported per spec; VMEM defaults suffice here)

# ---------------- config (small, consistent with a ViT-style module) ----------------
B = 2          # batch
S = 8          # number of patches / tokens (seq)
H = 32         # hidden_size
NH = 4         # num_attention_heads
HD = H // NH   # attention_head_size
KEEP = (0, 2, 3, 5, 6, 7)   # patch_indices_to_keep
P = len(KEEP)  # pruned query length


def _attn_kernel(hs_ref, wqkv_ref, bqkv_ref, wo_ref, bo_ref, out_ref):
    """Whole batch in one invocation. hs_ref: (B*S, H); out_ref: (B*S, H)."""
    hs = hs_ref[...]                                                     # (B*S, H)

    # Fused QKV projection: one MXU matmul, f32 accumulation, fused bias.
    qkv = jnp.dot(hs, wqkv_ref[...],
                  preferred_element_type=jnp.float32) + bqkv_ref[...]    # (B*S, 3H)
    q_all = qkv[:, 0:H]
    k_all = qkv[:, H:2 * H]
    v_all = qkv[:, 2 * H:3 * H]

    # Head-column masks, built once (VPU selects instead of 8-lane XLU column slices).
    lane = jax.lax.broadcasted_iota(jnp.int32, (1, H), 1)                # (1, H)
    head_masks = [((lane >= h * HD) & (lane < (h + 1) * HD)).astype(jnp.float32)
                  for h in range(NH)]

    scale = 1.0 / math.sqrt(HD)
    ctx_rows = []
    for b in range(B):                                                   # static unroll, B == 2
        r = slice(b * S, (b + 1) * S)                                    # sublane-aligned rows
        q, k, v = q_all[r], k_all[r], v_all[r]                           # (S, H) each
        ctx = jnp.zeros((S, H), jnp.float32)
        for h in range(NH):                                              # static unroll, NH == 4
            m = head_masks[h]
            # Masked full-width contraction == per-head Qh @ Kh^T (other heads' cols are zero).
            scores = jnp.dot(q * m, k.T,
                             preferred_element_type=jnp.float32) * scale  # (S, S)
            scores = scores - jnp.max(scores, axis=-1, keepdims=True)
            e = jnp.exp(scores)
            denom = jnp.sum(e, axis=-1, keepdims=True)                   # (S, 1)
            probs = e * pl.reciprocal(denom, approx=True)                # EUP reciprocal
            # probs @ (V masked to head h): fills exactly head h's output columns; accumulate.
            ctx = ctx + jnp.dot(probs, v * m, preferred_element_type=jnp.float32)
        ctx_rows.append(ctx)
    ctx_full = jnp.concatenate(ctx_rows, axis=0)                         # (B*S, H) row concat

    # ViTSelfOutput.dense: one matmul + one full-tile store.
    out = jnp.dot(ctx_full, wo_ref[...],
                  preferred_element_type=jnp.float32) + bo_ref[...]
    out_ref[...] = out.astype(out_ref.dtype)


def modified_vit_attention(hidden_states, patch_indices_to_keep, params):
    """hidden_states: (B, S, H) float32.  Returns (B, P, H)."""
    wq, bq, wk, bk, wv, bv, wo, bo = params

    # Fuse QKV weights / biases in the wrapper (constant-foldable glue).
    wqkv = jnp.concatenate([wq, wk, wv], axis=1)                         # (H, 3H)
    bqkv = jnp.concatenate([bq, bk, bv]).reshape(1, 3 * H)               # (1, 3H)
    bo2 = bo.reshape(1, H)

    hs2d = hidden_states.reshape(B * S, H)                               # (16, 32)

    out2d = pl.pallas_call(
        _attn_kernel,
        out_shape=jax.ShapeDtypeStruct((B * S, H), hidden_states.dtype),
        in_specs=[
            pl.BlockSpec((B * S, H), lambda: (0, 0)),    # hidden states (all tokens)
            pl.BlockSpec((H, 3 * H), lambda: (0, 0)),    # fused Wqkv
            pl.BlockSpec((1, 3 * H), lambda: (0, 0)),    # fused bqkv
            pl.BlockSpec((H, H), lambda: (0, 0)),        # Wo
            pl.BlockSpec((1, H), lambda: (0, 0)),        # bo
        ],
        out_specs=pl.BlockSpec((B * S, H), lambda: (0, 0)),
    )(hs2d, wqkv, bqkv, wo, bo2)

    out = out2d.reshape(B, S, H)
    idx = jnp.asarray(patch_indices_to_keep, dtype=jnp.int32)
    # Pruning queries == selecting output rows (attention + dense are row-wise in the query axis).
    return out[:, idx, :]


def _reference(hidden_states, idx, params):
    """Plain-JAX reference mirroring the PyTorch forward (inference)."""
    wq, bq, wk, bk, wv, bv, wo, bo = params
    q = hidden_states @ wq + bq
    k = hidden_states @ wk + bk
    v = hidden_states @ wv + bv

    def split(x):  # (B, S, H) -> (B, NH, S, HD)
        return x.reshape(B, -1, NH, HD).transpose(0, 2, 1, 3)

    qh, kh, vh = split(q), split(k), split(v)
    qh = qh[:, :, idx, :]                                   # prune queries
    scores = jnp.einsum('bhpd,bhkd->bhpk', qh, kh) / math.sqrt(HD)
    probs = jax.nn.softmax(scores, axis=-1)
    ctx = jnp.einsum('bhpk,bhkd->bhpd', probs, vh)
    ctx = ctx.transpose(0, 2, 1, 3).reshape(B, P, H)
    return ctx @ wo + bo


if __name__ == "__main__":
    key = jax.random.PRNGKey(0)
    ks = jax.random.split(key, 9)
    hidden_states = jax.random.normal(ks[0], (B, S, H), dtype=jnp.float32)

    def lin(k, fan_in):
        s = 1.0 / math.sqrt(fan_in)
        return jax.random.uniform(k, (H, H), minval=-s, maxval=s, dtype=jnp.float32)

    # deterministic synthetic parameters (Linear weights stored as (in, out); y = x @ W + b)
    wq = lin(ks[1], H); bq = jax.random.normal(ks[2], (H,), dtype=jnp.float32) * 0.02
    wk = lin(ks[3], H); bk = jax.random.normal(ks[4], (H,), dtype=jnp.float32) * 0.02
    wv = lin(ks[5], H); bv = jax.random.normal(ks[6], (H,), dtype=jnp.float32) * 0.02
    wo = lin(ks[7], H); bo = jax.random.normal(ks[8], (H,), dtype=jnp.float32) * 0.02
    params = (wq, bq, wk, bk, wv, bv, wo, bo)

    out = modified_vit_attention(hidden_states, KEEP, params)
    out = jax.block_until_ready(out)

    ref = _reference(hidden_states, jnp.asarray(KEEP, dtype=jnp.int32), params)
    assert out.shape == (B, P, H)
    # Tolerance loosened slightly (5e-3) to account for the EUP approximate reciprocal used
    # in the softmax normalisation (perf feedback); semantics are otherwise exact f32.
    assert jnp.allclose(out, ref, atol=5e-3, rtol=5e-3), "mismatch vs reference"

    print("KERNEL_OK")
</pallas_src>

<mosaic_0001>
module attributes {stable_mosaic.version = 11 : i64} {
  func.func @_attn_kernel(%arg0: memref<16x32xf32, #tpu.memory_space<vmem>>, %arg1: memref<32x96xf32, #tpu.memory_space<vmem>>, %arg2: memref<1x96xf32, #tpu.memory_space<vmem>>, %arg3: memref<32x32xf32, #tpu.memory_space<vmem>>, %arg4: memref<1x32xf32, #tpu.memory_space<vmem>>, %arg5: memref<16x32xf32, #tpu.memory_space<vmem>>) attributes {dimension_semantics = [], scalar_prefetch = 0 : i64, scratch_operands = 0 : i64, tpu.core_type = #tpu.core_type<tc>} {
    %c0 = arith.constant 0 : index
    %c0_0 = arith.constant 0 : index
    %0 = vector.load %arg0[%c0, %c0_0] : memref<16x32xf32, #tpu.memory_space<vmem>>, vector<16x32xf32>
    %c0_1 = arith.constant 0 : index
    %c0_2 = arith.constant 0 : index
    %1 = vector.load %arg1[%c0_1, %c0_2] : memref<32x96xf32, #tpu.memory_space<vmem>>, vector<32x96xf32>
    %cst = arith.constant dense<0.000000e+00> : vector<16x96xf32>
    %2 = tpu.matmul %0, %1, %cst {dimension_numbers = #tpu.dot_dimension_numbers<[1], [0], [0], [1], [0, 0, 1, 1], [], []>} : vector<16x32xf32>, vector<32x96xf32>, vector<16x96xf32> -> vector<16x96xf32>
    %c0_3 = arith.constant 0 : index
    %c0_4 = arith.constant 0 : index
    %3 = vector.load %arg2[%c0_3, %c0_4] : memref<1x96xf32, #tpu.memory_space<vmem>>, vector<1x96xf32>
    %4 = vector.broadcast %3 : vector<1x96xf32> to vector<16x96xf32>
    %5 = arith.addf %2, %4 : vector<16x96xf32>
    %6 = vector.extract_strided_slice %5 {offsets = [0, 0], sizes = [16, 32], strides = [1, 1]} : vector<16x96xf32> to vector<16x32xf32>
    %7 = vector.extract_strided_slice %5 {offsets = [0, 32], sizes = [16, 32], strides = [1, 1]} : vector<16x96xf32> to vector<16x32xf32>
    %8 = vector.extract_strided_slice %5 {offsets = [0, 64], sizes = [16, 32], strides = [1, 1]} : vector<16x96xf32> to vector<16x32xf32>
    %9 = tpu.iota {dimensions = array<i32: 1>} : vector<1x32xi32>
    %c0_i32 = arith.constant 0 : i32
    %10 = vector.broadcast %c0_i32 : i32 to vector<1x32xi32>
    %11 = arith.cmpi sge, %9, %10 : vector<1x32xi32>
    %c8_i32 = arith.constant 8 : i32
    %12 = vector.broadcast %c8_i32 : i32 to vector<1x32xi32>
    %13 = arith.cmpi slt, %9, %12 : vector<1x32xi32>
    %14 = arith.andi %11, %13 : vector<1x32xi1>
    %15 = arith.extui %14 : vector<1x32xi1> to vector<1x32xi32>
    %16 = arith.sitofp %15 : vector<1x32xi32> to vector<1x32xf32>
    %c8_i32_5 = arith.constant 8 : i32
    %17 = vector.broadcast %c8_i32_5 : i32 to vector<1x32xi32>
    %18 = arith.cmpi sge, %9, %17 : vector<1x32xi32>
    %c16_i32 = arith.constant 16 : i32
    %19 = vector.broadcast %c16_i32 : i32 to vector<1x32xi32>
    %20 = arith.cmpi slt, %9, %19 : vector<1x32xi32>
    %21 = arith.andi %18, %20 : vector<1x32xi1>
    %22 = arith.extui %21 : vector<1x32xi1> to vector<1x32xi32>
    %23 = arith.sitofp %22 : vector<1x32xi32> to vector<1x32xf32>
    %c16_i32_6 = arith.constant 16 : i32
    %24 = vector.broadcast %c16_i32_6 : i32 to vector<1x32xi32>
    %25 = arith.cmpi sge, %9, %24 : vector<1x32xi32>
    %c24_i32 = arith.constant 24 : i32
    %26 = vector.broadcast %c24_i32 : i32 to vector<1x32xi32>
    %27 = arith.cmpi slt, %9, %26 : vector<1x32xi32>
    %28 = arith.andi %25, %27 : vector<1x32xi1>
    %29 = arith.extui %28 : vector<1x32xi1> to vector<1x32xi32>
    %30 = arith.sitofp %29 : vector<1x32xi32> to vector<1x32xf32>
    %c24_i32_7 = arith.constant 24 : i32
    %31 = vector.broadcast %c24_i32_7 : i32 to vector<1x32xi32>
    %32 = arith.cmpi sge, %9, %31 : vector<1x32xi32>
    %c32_i32 = arith.constant 32 : i32
    %33 = vector.broadcast %c32_i32 : i32 to vector<1x32xi32>
    %34 = arith.cmpi slt, %9, %33 : vector<1x32xi32>
    %35 = arith.andi %32, %34 : vector<1x32xi1>
    %36 = arith.extui %35 : vector<1x32xi1> to vector<1x32xi32>
    %37 = arith.sitofp %36 : vector<1x32xi32> to vector<1x32xf32>
    %38 = vector.extract_strided_slice %6 {offsets = [0, 0], sizes = [8, 32], strides = [1, 1]} : vector<16x32xf32> to vector<8x32xf32>
    %39 = vector.extract_strided_slice %7 {offsets = [0, 0], sizes = [8, 32], strides = [1, 1]} : vector<16x32xf32> to vector<8x32xf32>
    %40 = vector.extract_strided_slice %8 {offsets = [0, 0], sizes = [8, 32], strides = [1, 1]} : vector<16x32xf32> to vector<8x32xf32>
    %cst_8 = arith.constant 0.000000e+00 : f32
    %41 = vector.broadcast %cst_8 : f32 to vector<8x32xf32>
    %42 = vector.broadcast %16 : vector<1x32xf32> to vector<8x32xf32>
    %43 = arith.mulf %38, %42 : vector<8x32xf32>
    %44 = tpu.transpose %39, [1, 0] : vector<8x32xf32> -> vector<32x8xf32>
    %cst_9 = arith.constant dense<0.000000e+00> : vector<8x8xf32>
    %45 = tpu.matmul %43, %44, %cst_9 {dimension_numbers = #tpu.dot_dimension_numbers<[1], [0], [0], [1], [0, 0, 1, 1], [], []>} : vector<8x32xf32>, vector<32x8xf32>, vector<8x8xf32> -> vector<8x8xf32>
    %cst_10 = arith.constant 0.353553385 : f32
    %46 = vector.broadcast %cst_10 : f32 to vector<8x8xf32>
    %47 = arith.mulf %45, %46 : vector<8x8xf32>
    %cst_11 = arith.constant dense<0xFF800000> : vector<8xf32>
    %48 = vector.multi_reduction <maximumf>, %47, %cst_11 [1] : vector<8x8xf32> to vector<8xf32>
    %49 = vector.shape_cast %48 : vector<8xf32> to vector<8x1xf32>
    %50 = vector.broadcast %49 : vector<8x1xf32> to vector<8x8xf32>
    %51 = arith.subf %47, %50 : vector<8x8xf32>
    %52 = math.exp %51 : vector<8x8xf32>
    %cst_12 = arith.constant dense<0.000000e+00> : vector<8xf32>
    %53 = vector.multi_reduction <add>, %52, %cst_12 [1] : vector<8x8xf32> to vector<8xf32>
    %54 = vector.shape_cast %53 : vector<8xf32> to vector<8x1xf32>
    %55 = tpu.reciprocal %54 {approx = true} : vector<8x1xf32> -> vector<8x1xf32>
    %56 = vector.broadcast %55 : vector<8x1xf32> to vector<8x8xf32>
    %57 = arith.mulf %52, %56 : vector<8x8xf32>
    %58 = vector.broadcast %16 : vector<1x32xf32> to vector<8x32xf32>
    %59 = arith.mulf %40, %58 : vector<8x32xf32>
    %cst_13 = arith.constant dense<0.000000e+00> : vector<8x32xf32>
    %60 = tpu.matmul %57, %59, %cst_13 {dimension_numbers = #tpu.dot_dimension_numbers<[1], [0], [0], [1], [0, 0, 1, 1], [], []>} : vector<8x8xf32>, vector<8x32xf32>, vector<8x32xf32> -> vector<8x32xf32>
    %61 = arith.addf %41, %60 : vector<8x32xf32>
    %62 = vector.broadcast %23 : vector<1x32xf32> to vector<8x32xf32>
    %63 = arith.mulf %38, %62 : vector<8x32xf32>
    %64 = tpu.transpose %39, [1, 0] : vector<8x32xf32> -> vector<32x8xf32>
    %cst_14 = arith.constant dense<0.000000e+00> : vector<8x8xf32>
    %65 = tpu.matmul %63, %64, %cst_14 {dimension_numbers = #tpu.dot_dimension_numbers<[1], [0], [0], [1], [0, 0, 1, 1], [], []>} : vector<8x32xf32>, vector<32x8xf32>, vector<8x8xf32> -> vector<8x8xf32>
    %cst_15 = arith.constant 0.353553385 : f32
    %66 = vector.broadcast %cst_15 : f32 to vector<8x8xf32>
    %67 = arith.mulf %65, %66 : vector<8x8xf32>
    %cst_16 = arith.constant dense<0xFF800000> : vector<8xf32>
    %68 = vector.multi_reduction <maximumf>, %67, %cst_16 [1] : vector<8x8xf32> to vector<8xf32>
    %69 = vector.shape_cast %68 : vector<8xf32> to vector<8x1xf32>
    %70 = vector.broadcast %69 : vector<8x1xf32> to vector<8x8xf32>
    %71 = arith.subf %67, %70 : vector<8x8xf32>
    %72 = math.exp %71 : vector<8x8xf32>
    %cst_17 = arith.constant dense<0.000000e+00> : vector<8xf32>
    %73 = vector.multi_reduction <add>, %72, %cst_17 [1] : vector<8x8xf32> to vector<8xf32>
    %74 = vector.shape_cast %73 : vector<8xf32> to vector<8x1xf32>
    %75 = tpu.reciprocal %74 {approx = true} : vector<8x1xf32> -> vector<8x1xf32>
    %76 = vector.broadcast %75 : vector<8x1xf32> to vector<8x8xf32>
    %77 = arith.mulf %72, %76 : vector<8x8xf32>
    %78 = vector.broadcast %23 : vector<1x32xf32> to vector<8x32xf32>
    %79 = arith.mulf %40, %78 : vector<8x32xf32>
    %cst_18 = arith.constant dense<0.000000e+00> : vector<8x32xf32>
    %80 = tpu.matmul %77, %79, %cst_18 {dimension_numbers = #tpu.dot_dimension_numbers<[1], [0], [0], [1], [0, 0, 1, 1], [], []>} : vector<8x8xf32>, vector<8x32xf32>, vector<8x32xf32> -> vector<8x32xf32>
    %81 = arith.addf %61, %80 : vector<8x32xf32>
    %82 = vector.broadcast %30 : vector<1x32xf32> to vector<8x32xf32>
    %83 = arith.mulf %38, %82 : vector<8x32xf32>
    %84 = tpu.transpose %39, [1, 0] : vector<8x32xf32> -> vector<32x8xf32>
    %cst_19 = arith.constant dense<0.000000e+00> : vector<8x8xf32>
    %85 = tpu.matmul %83, %84, %cst_19 {dimension_numbers = #tpu.dot_dimension_numbers<[1], [0], [0], [1], [0, 0, 1, 1], [], []>} : vector<8x32xf32>, vector<32x8xf32>, vector<8x8xf32> -> vector<8x8xf32>
    %cst_20 = arith.constant 0.353553385 : f32
    %86 = vector.broadcast %cst_20 : f32 to vector<8x8xf32>
    %87 = arith.mulf %85, %86 : vector<8x8xf32>
    %cst_21 = arith.constant dense<0xFF800000> : vector<8xf32>
    %88 = vector.multi_reduction <maximumf>, %87, %cst_21 [1] : vector<8x8xf32> to vector<8xf32>
    %89 = vector.shape_cast %88 : vector<8xf32> to vector<8x1xf32>
    %90 = vector.broadcast %89 : vector<8x1xf32> to vector<8x8xf32>
    %91 = arith.subf %87, %90 : vector<8x8xf32>
    %92 = math.exp %91 : vector<8x8xf32>
    %cst_22 = arith.constant dense<0.000000e+00> : vector<8xf32>
    %93 = vector.multi_reduction <add>, %92, %cst_22 [1] : vector<8x8xf32> to vector<8xf32>
    %94 = vector.shape_cast %93 : vector<8xf32> to vector<8x1xf32>
    %95 = tpu.reciprocal %94 {approx = true} : vector<8x1xf32> -> vector<8x1xf32>
    %96 = vector.broadcast %95 : vector<8x1xf32> to vector<8x8xf32>
    %97 = arith.mulf %92, %96 : vector<8x8xf32>
    %98 = vector.broadcast %30 : vector<1x32xf32> to vector<8x32xf32>
    %99 = arith.mulf %40, %98 : vector<8x32xf32>
    %cst_23 = arith.constant dense<0.000000e+00> : vector<8x32xf32>
    %100 = tpu.matmul %97, %99, %cst_23 {dimension_numbers = #tpu.dot_dimension_numbers<[1], [0], [0], [1], [0, 0, 1, 1], [], []>} : vector<8x8xf32>, vector<8x32xf32>, vector<8x32xf32> -> vector<8x32xf32>
    %101 = arith.addf %81, %100 : vector<8x32xf32>
    %102 = vector.broadcast %37 : vector<1x32xf32> to vector<8x32xf32>
    %103 = arith.mulf %38, %102 : vector<8x32xf32>
    %104 = tpu.transpose %39, [1, 0] : vector<8x32xf32> -> vector<32x8xf32>
    %cst_24 = arith.constant dense<0.000000e+00> : vector<8x8xf32>
    %105 = tpu.matmul %103, %104, %cst_24 {dimension_numbers = #tpu.dot_dimension_numbers<[1], [0], [0], [1], [0, 0, 1, 1], [], []>} : vector<8x32xf32>, vector<32x8xf32>, vector<8x8xf32> -> vector<8x8xf32>
    %cst_25 = arith.constant 0.353553385 : f32
    %106 = vector.broadcast %cst_25 : f32 to vector<8x8xf32>
    %107 = arith.mulf %105, %106 : vector<8x8xf32>
    %cst_26 = arith.constant dense<0xFF800000> : vector<8xf32>
    %108 = vector.multi_reduction <maximumf>, %107, %cst_26 [1] : vector<8x8xf32> to vector<8xf32>
    %109 = vector.shape_cast %108 : vector<8xf32> to vector<8x1xf32>
    %110 = vector.broadcast %109 : vector<8x1xf32> to vector<8x8xf32>
    %111 = arith.subf %107, %110 : vector<8x8xf32>
    %112 = math.exp %111 : vector<8x8xf32>
    %cst_27 = arith.constant dense<0.000000e+00> : vector<8xf32>
    %113 = vector.multi_reduction <add>, %112, %cst_27 [1] : vector<8x8xf32> to vector<8xf32>
    %114 = vector.shape_cast %113 : vector<8xf32> to vector<8x1xf32>
    %115 = tpu.reciprocal %114 {approx = true} : vector<8x1xf32> -> vector<8x1xf32>
    %116 = vector.broadcast %115 : vector<8x1xf32> to vector<8x8xf32>
    %117 = arith.mulf %112, %116 : vector<8x8xf32>
    %118 = vector.broadcast %37 : vector<1x32xf32> to vector<8x32xf32>
    %119 = arith.mulf %40, %118 : vector<8x32xf32>
    %cst_28 = arith.constant dense<0.000000e+00> : vector<8x32xf32>
    %120 = tpu.matmul %117, %119, %cst_28 {dimension_numbers = #tpu.dot_dimension_numbers<[1], [0], [0], [1], [0, 0, 1, 1], [], []>} : vector<8x8xf32>, vector<8x32xf32>, vector<8x32xf32> -> vector<8x32xf32>
    %121 = arith.addf %101, %120 : vector<8x32xf32>
    %122 = vector.extract_strided_slice %6 {offsets = [8, 0], sizes = [8, 32], strides = [1, 1]} : vector<16x32xf32> to vector<8x32xf32>
    %123 = vector.extract_strided_slice %7 {offsets = [8, 0], sizes = [8, 32], strides = [1, 1]} : vector<16x32xf32> to vector<8x32xf32>
    %124 = vector.extract_strided_slice %8 {offsets = [8, 0], sizes = [8, 32], strides = [1, 1]} : vector<16x32xf32> to vector<8x32xf32>
    %cst_29 = arith.constant 0.000000e+00 : f32
    %125 = vector.broadcast %cst_29 : f32 to vector<8x32xf32>
    %126 = vector.broadcast %16 : vector<1x32xf32> to vector<8x32xf32>
    %127 = arith.mulf %122, %126 : vector<8x32xf32>
    %128 = tpu.transpose %123, [1, 0] : vector<8x32xf32> -> vector<32x8xf32>
    %cst_30 = arith.constant dense<0.000000e+00> : vector<8x8xf32>
    %129 = tpu.matmul %127, %128, %cst_30 {dimension_numbers = #tpu.dot_dimension_numbers<[1], [0], [0], [1], [0, 0, 1, 1], [], []>} : vector<8x32xf32>, vector<32x8xf32>, vector<8x8xf32> -> vector<8x8xf32>
    %cst_31 = arith.constant 0.353553385 : f32
    %130 = vector.broadcast %cst_31 : f32 to vector<8x8xf32>
    %131 = arith.mulf %129, %130 : vector<8x8xf32>
    %cst_32 = arith.constant dense<0xFF800000> : vector<8xf32>
    %132 = vector.multi_reduction <maximumf>, %131, %cst_32 [1] : vector<8x8xf32> to vector<8xf32>
    %133 = vector.shape_cast %132 : vector<8xf32> to vector<8x1xf32>
    %134 = vector.broadcast %133 : vector<8x1xf32> to vector<8x8xf32>
    %135 = arith.subf %131, %134 : vector<8x8xf32>
    %136 = math.exp %135 : vector<8x8xf32>
    %cst_33 = arith.constant dense<0.000000e+00> : vector<8xf32>
    %137 = vector.multi_reduction <add>, %136, %cst_33 [1] : vector<8x8xf32> to vector<8xf32>
    %138 = vector.shape_cast %137 : vector<8xf32> to vector<8x1xf32>
    %139 = tpu.reciprocal %138 {approx = true} : vector<8x1xf32> -> vector<8x1xf32>
    %140 = vector.broadcast %139 : vector<8x1xf32> to vector<8x8xf32>
    %141 = arith.mulf %136, %140 : vector<8x8xf32>
    %142 = vector.broadcast %16 : vector<1x32xf32> to vector<8x32xf32>
    %143 = arith.mulf %124, %142 : vector<8x32xf32>
    %cst_34 = arith.constant dense<0.000000e+00> : vector<8x32xf32>
    %144 = tpu.matmul %141, %143, %cst_34 {dimension_numbers = #tpu.dot_dimension_numbers<[1], [0], [0], [1], [0, 0, 1, 1], [], []>} : vector<8x8xf32>, vector<8x32xf32>, vector<8x32xf32> -> vector<8x32xf32>
    %145 = arith.addf %125, %144 : vector<8x32xf32>
    %146 = vector.broadcast %23 : vector<1x32xf32> to vector<8x32xf32>
    %147 = arith.mulf %122, %146 : vector<8x32xf32>
    %148 = tpu.transpose %123, [1, 0] : vector<8x32xf32> -> vector<32x8xf32>
    %cst_35 = arith.constant dense<0.000000e+00> : vector<8x8xf32>
    %149 = tpu.matmul %147, %148, %cst_35 {dimension_numbers = #tpu.dot_dimension_numbers<[1], [0], [0], [1], [0, 0, 1, 1], [], []>} : vector<8x32xf32>, vector<32x8xf32>, vector<8x8xf32> -> vector<8x8xf32>
    %cst_36 = arith.constant 0.353553385 : f32
    %150 = vector.broadcast %cst_36 : f32 to vector<8x8xf32>
    %151 = arith.mulf %149, %150 : vector<8x8xf32>
    %cst_37 = arith.constant dense<0xFF800000> : vector<8xf32>
    %152 = vector.multi_reduction <maximumf>, %151, %cst_37 [1] : vector<8x8xf32> to vector<8xf32>
    %153 = vector.shape_cast %152 : vector<8xf32> to vector<8x1xf32>
    %154 = vector.broadcast %153 : vector<8x1xf32> to vector<8x8xf32>
    %155 = arith.subf %151, %154 : vector<8x8xf32>
    %156 = math.exp %155 : vector<8x8xf32>
    %cst_38 = arith.constant dense<0.000000e+00> : vector<8xf32>
    %157 = vector.multi_reduction <add>, %156, %cst_38 [1] : vector<8x8xf32> to vector<8xf32>
    %158 = vector.shape_cast %157 : vector<8xf32> to vector<8x1xf32>
    %159 = tpu.reciprocal %158 {approx = true} : vector<8x1xf32> -> vector<8x1xf32>
    %160 = vector.broadcast %159 : vector<8x1xf32> to vector<8x8xf32>
    %161 = arith.mulf %156, %160 : vector<8x8xf32>
    %162 = vector.broadcast %23 : vector<1x32xf32> to vector<8x32xf32>
    %163 = arith.mulf %124, %162 : vector<8x32xf32>
    %cst_39 = arith.constant dense<0.000000e+00> : vector<8x32xf32>
    %164 = tpu.matmul %161, %163, %cst_39 {dimension_numbers = #tpu.dot_dimension_numbers<[1], [0], [0], [1], [0, 0, 1, 1], [], []>} : vector<8x8xf32>, vector<8x32xf32>, vector<8x32xf32> -> vector<8x32xf32>
    %165 = arith.addf %145, %164 : vector<8x32xf32>
    %166 = vector.broadcast %30 : vector<1x32xf32> to vector<8x32xf32>
    %167 = arith.mulf %122, %166 : vector<8x32xf32>
    %168 = tpu.transpose %123, [1, 0] : vector<8x32xf32> -> vector<32x8xf32>
    %cst_40 = arith.constant dense<0.000000e+00> : vector<8x8xf32>
    %169 = tpu.matmul %167, %168, %cst_40 {dimension_numbers = #tpu.dot_dimension_numbers<[1], [0], [0], [1], [0, 0, 1, 1], [], []>} : vector<8x32xf32>, vector<32x8xf32>, vector<8x8xf32> -> vector<8x8xf32>
    %cst_41 = arith.constant 0.353553385 : f32
    %170 = vector.broadcast %cst_41 : f32 to vector<8x8xf32>
    %171 = arith.mulf %169, %170 : vector<8x8xf32>
    %cst_42 = arith.constant dense<0xFF800000> : vector<8xf32>
    %172 = vector.multi_reduction <maximumf>, %171, %cst_42 [1] : vector<8x8xf32> to vector<8xf32>
    %173 = vector.shape_cast %172 : vector<8xf32> to vector<8x1xf32>
    %174 = vector.broadcast %173 : vector<8x1xf32> to vector<8x8xf32>
    %175 = arith.subf %171, %174 : vector<8x8xf32>
    %176 = math.exp %175 : vector<8x8xf32>
    %cst_43 = arith.constant dense<0.000000e+00> : vector<8xf32>
    %177 = vector.multi_reduction <add>, %176, %cst_43 [1] : vector<8x8xf32> to vector<8xf32>
    %178 = vector.shape_cast %177 : vector<8xf32> to vector<8x1xf32>
    %179 = tpu.reciprocal %178 {approx = true} : vector<8x1xf32> -> vector<8x1xf32>
    %180 = vector.broadcast %179 : vector<8x1xf32> to vector<8x8xf32>
    %181 = arith.mulf %176, %180 : vector<8x8xf32>
    %182 = vector.broadcast %30 : vector<1x32xf32> to vector<8x32xf32>
    %183 = arith.mulf %124, %182 : vector<8x32xf32>
    %cst_44 = arith.constant dense<0.000000e+00> : vector<8x32xf32>
    %184 = tpu.matmul %181, %183, %cst_44 {dimension_numbers = #tpu.dot_dimension_numbers<[1], [0], [0], [1], [0, 0, 1, 1], [], []>} : vector<8x8xf32>, vector<8x32xf32>, vector<8x32xf32> -> vector<8x32xf32>
    %185 = arith.addf %165, %184 : vector<8x32xf32>
    %186 = vector.broadcast %37 : vector<1x32xf32> to vector<8x32xf32>
    %187 = arith.mulf %122, %186 : vector<8x32xf32>
    %188 = tpu.transpose %123, [1, 0] : vector<8x32xf32> -> vector<32x8xf32>
    %cst_45 = arith.constant dense<0.000000e+00> : vector<8x8xf32>
    %189 = tpu.matmul %187, %188, %cst_45 {dimension_numbers = #tpu.dot_dimension_numbers<[1], [0], [0], [1], [0, 0, 1, 1], [], []>} : vector<8x32xf32>, vector<32x8xf32>, vector<8x8xf32> -> vector<8x8xf32>
    %cst_46 = arith.constant 0.353553385 : f32
    %190 = vector.broadcast %cst_46 : f32 to vector<8x8xf32>
    %191 = arith.mulf %189, %190 : vector<8x8xf32>
    %cst_47 = arith.constant dense<0xFF800000> : vector<8xf32>
    %192 = vector.multi_reduction <maximumf>, %191, %cst_47 [1] : vector<8x8xf32> to vector<8xf32>
    %193 = vector.shape_cast %192 : vector<8xf32> to vector<8x1xf32>
    %194 = vector.broadcast %193 : vector<8x1xf32> to vector<8x8xf32>
    %195 = arith.subf %191, %194 : vector<8x8xf32>
    %196 = math.exp %195 : vector<8x8xf32>
    %cst_48 = arith.constant dense<0.000000e+00> : vector<8xf32>
    %197 = vector.multi_reduction <add>, %196, %cst_48 [1] : vector<8x8xf32> to vector<8xf32>
    %198 = vector.shape_cast %197 : vector<8xf32> to vector<8x1xf32>
    %199 = tpu.reciprocal %198 {approx = true} : vector<8x1xf32> -> vector<8x1xf32>
    %200 = vector.broadcast %199 : vector<8x1xf32> to vector<8x8xf32>
    %201 = arith.mulf %196, %200 : vector<8x8xf32>
    %202 = vector.broadcast %37 : vector<1x32xf32> to vector<8x32xf32>
    %203 = arith.mulf %124, %202 : vector<8x32xf32>
    %cst_49 = arith.constant dense<0.000000e+00> : vector<8x32xf32>
    %204 = tpu.matmul %201, %203, %cst_49 {dimension_numbers = #tpu.dot_dimension_numbers<[1], [0], [0], [1], [0, 0, 1, 1], [], []>} : vector<8x8xf32>, vector<8x32xf32>, vector<8x32xf32> -> vector<8x32xf32>
    %205 = arith.addf %185, %204 : vector<8x32xf32>
    %206 = tpu.concatenate %121, %205 in 0 : vector<8x32xf32>, vector<8x32xf32> -> vector<16x32xf32>
    %c0_50 = arith.constant 0 : index
    %c0_51 = arith.constant 0 : index
    %207 = vector.load %arg3[%c0_50, %c0_51] : memref<32x32xf32, #tpu.memory_space<vmem>>, vector<32x32xf32>
    %cst_52 = arith.constant dense<0.000000e+00> : vector<16x32xf32>
    %208 = tpu.matmul %206, %207, %cst_52 {dimension_numbers = #tpu.dot_dimension_numbers<[1], [0], [0], [1], [0, 0, 1, 1], [], []>} : vector<16x32xf32>, vector<32x32xf32>, vector<16x32xf32> -> vector<16x32xf32>
    %c0_53 = arith.constant 0 : index
    %c0_54 = arith.constant 0 : index
    %209 = vector.load %arg4[%c0_53, %c0_54] : memref<1x32xf32, #tpu.memory_space<vmem>>, vector<1x32xf32>
    %210 = vector.broadcast %209 : vector<1x32xf32> to vector<16x32xf32>
    %211 = arith.addf %208, %210 : vector<16x32xf32>
    %c0_55 = arith.constant 0 : index
    %c0_56 = arith.constant 0 : index
    %212 = vector.load %arg5[%c0_55, %c0_56] : memref<16x32xf32, #tpu.memory_space<vmem>>, vector<16x32xf32>
    tpu.vector_store %arg5[%c0_55, %c0_56], %211 {strides = array<i32>} : memref<16x32xf32, #tpu.memory_space<vmem>>, vector<16x32xf32>,
    return
  }
}

</mosaic_0001>

<llo_original>
// kernel: tpu_custom_call.1
$region0: #{tpu_custom_call.1}
  #allocation0 [shape = 'u32[]', space=smem, size = 0x4, offset = 0x4, fixed_abs, tag = 'smem constant byte address 0x4 - core index']
  #allocation1 [shape = 'u32[72,128]{1,0:T(1,128)}', space=vmem, size = 0x9000, scoped, tag = 'internal scratch']
  %s0 = inlined_call_operand.hbm [shape: f32[16,32], index: 0, kind: input, shape index: {}]
  %s1 = inlined_call_operand.hbm [shape: f32[32,96], index: 1, kind: input, shape index: {}]
  %s2 = inlined_call_operand.vmem [shape: f32[1,96], index: 2, kind: input, shape index: {}]
  %s3 = inlined_call_operand.hbm [shape: f32[32,32], index: 3, kind: input, shape index: {}]
  %s4 = inlined_call_operand.vmem [shape: f32[1,32], index: 4, kind: input, shape index: {}]
  %s5 = inlined_call_operand.hbm [shape: f32[16,32], index: 5, kind: output, shape index: {}]
  %s6 = sld [smem:[#allocation0]]
  $region42: #{tpu_custom_call.1} parent=0
    _
  %s8 = ssub.s32 1, %s6
  %s9 = scalar_select 0, %s8, %s6
  $region1: #{tpu_custom_call.1} parent=0
    #allocation2 [shape = 'u8[8192]{0}', space=vmem, size = 0x2000, scoped, tag = 'input window, operand 0, single buffered']
    #allocation3 [shape = 's32[1]{0}', space=sflag, size = 0x4, scoped, tag = 'scoped memory for tpu_custom_call.1']
    #allocation4 [shape = 's32[1]{0}', space=sflag, size = 0x4, scoped, tag = 'scoped memory for tpu_custom_call.1']
    #allocation5 [shape = 'u8[16384]{0}', space=vmem, size = 0x4000, scoped, tag = 'input window, operand 1, single buffered']
    #allocation6 [shape = 's32[1]{0}', space=sflag, size = 0x4, scoped, tag = 'scoped memory for tpu_custom_call.1']
    #allocation7 [shape = 'u8[16384]{0}', space=vmem, size = 0x4000, scoped, tag = 'input window, operand 3, single buffered']
    #allocation8 [shape = 'u8[8192]{0}', space=vmem, size = 0x2000, scoped, tag = 'output window, operand 0, single buffered']
    %10 = vsyncpa [#allocation3], 0
    %11 = vsyncpa [#allocation6], 0
    %12 = vsyncpa [#allocation4], 0
    // Predicated region
    $region2: #{tpu_custom_call.1} parent=1 // pred_check
      _
    $region3: #{tpu_custom_call.1} parent=1 // pred_check_branch
      %14 = sbr.rel (0) target = $region5
    $region4: #{tpu_custom_call.1} parent=1 // pred_region
      %16 = vsyncadd [#allocation3], 0
      %s17 = sshll.u32 %s0, 4
      %s18 = int_to_ptr.hbm [resolvable:$true] %s17
      %s19 = sshll.u32 [#allocation2], 4
      %s20 = int_to_ptr.vmem [resolvable:$true] %s19
      %25 = dma.hbm_to_vmem [thread:$0]  %s18, 256, %s20, [#allocation3], 128, 128, 8
    $region5: #{tpu_custom_call.1} parent=1 // pred_fallthru
      _
    // Predicated region
    $region6: #{tpu_custom_call.1} parent=1 // pred_check
      _
    $region7: #{tpu_custom_call.1} parent=1 // pred_check_branch
      %27 = sbr.rel (0) target = $region9
    $region8: #{tpu_custom_call.1} parent=1 // pred_region
      %29 = vsyncadd [#allocation6], 0
      %s30 = sshll.u32 %s1, 4
      %s31 = int_to_ptr.hbm [resolvable:$true] %s30
      %s32 = sshll.u32 [#allocation5], 4
      %s33 = int_to_ptr.vmem [resolvable:$true] %s32
      %38 = dma.hbm_to_vmem [thread:$0]  %s31, 512, %s33, [#allocation6], 128, 128, 8
    $region9: #{tpu_custom_call.1} parent=1 // pred_fallthru
      _
    // Predicated region
    $region10: #{tpu_custom_call.1} parent=1 // pred_check
      _
    $region11: #{tpu_custom_call.1} parent=1 // pred_check_branch
      %40 = sbr.rel (0) target = $region13
    $region12: #{tpu_custom_call.1} parent=1 // pred_region
      _
    $region13: #{tpu_custom_call.1} parent=1 // pred_fallthru
      _
    // Predicated region
    $region14: #{tpu_custom_call.1} parent=1 // pred_check
      _
    $region15: #{tpu_custom_call.1} parent=1 // pred_check_branch
      %42 = sbr.rel (0) target = $region17
    $region16: #{tpu_custom_call.1} parent=1 // pred_region
      %44 = vsyncadd [#allocation6], 0
      %s45 = sshll.u32 %s3, 4
      %s46 = int_to_ptr.hbm [resolvable:$true] %s45
      %s47 = sshll.u32 [#allocation7], 4
      %s48 = int_to_ptr.vmem [resolvable:$true] %s47
      %53 = dma.hbm_to_vmem [thread:$0]  %s46, 512, %s48, [#allocation6], 128, 128, 8
    $region17: #{tpu_custom_call.1} parent=1 // pred_fallthru
      _
    // Predicated region
    $region18: #{tpu_custom_call.1} parent=1 // pred_check
      _
    $region19: #{tpu_custom_call.1} parent=1 // pred_check_branch
      %55 = sbr.rel (0) target = $region21
    $region20: #{tpu_custom_call.1} parent=1 // pred_region
      _
    $region21: #{tpu_custom_call.1} parent=1 // pred_fallthru
      _
    // Predicated region
    $region22: #{tpu_custom_call.1} parent=1 // pred_check
      _
    $region23: #{tpu_custom_call.1} parent=1 // pred_check_branch
      %57 = sbr.rel (0) target = $region25
    $region24: #{tpu_custom_call.1} parent=1 // pred_region
      %59 = dma.done [#allocation3], 256
    $region25: #{tpu_custom_call.1} parent=1 // pred_fallthru
      _
    // Predicated region
    $region26: #{tpu_custom_call.1} parent=1 // pred_check
      _
    $region27: #{tpu_custom_call.1} parent=1 // pred_check_branch
      %61 = sbr.rel (0) target = $region29
    $region28: #{tpu_custom_call.1} parent=1 // pred_region
      %63 = dma.done [#allocation6], 512
    $region29: #{tpu_custom_call.1} parent=1 // pred_fallthru
      _
    // Predicated region
    $region30: #{tpu_custom_call.1} parent=1 // pred_check
      _
    $region31: #{tpu_custom_call.1} parent=1 // pred_check_branch
      %65 = sbr.rel (0) target = $region33
    $region32: #{tpu_custom_call.1} parent=1 // pred_region
      %67 = dma.done [#allocation6], 512
    $region33: #{tpu_custom_call.1} parent=1 // pred_fallthru
      _
    %v68 = vld [vmem:[#allocation2] sm:$0xff]
    %v69 = vld [vmem:[#allocation2 + $0x8] sm:$0xff]
    %v70 = vld [vmem:[#allocation5] sm:$0xff]
    %v71 = vld [vmem:[#allocation5 + $0x8] sm:$0xff]
    %v72 = vld [vmem:[#allocation5 + $0x10] sm:$0xff]
    %v73 = vld [vmem:[#allocation5 + $0x18] sm:$0xff]
    %v74 = vld [vmem:[%s2] sm:$0x1]
    %v76 = vperm.slane %v74, 0
    %vm78 = vcmask 261120
    %v80 = vsel %vm78, %v68, 0
    %v83 = vsel %vm78, %v69, 0
    %85 = vmatpush.msra.mxu0 0.0
    %86 = vmatpush.msra.mxu0 0.0
    %87 = vmatpush.msra.mxu0 0.0
    %88 = vmatpush.msra.mxu0 0.0
    %89 = vmatpush.msra.mxu0 0.0
    %90 = vmatpush.msra.mxu0 0.0
    %91 = vmatpush.msra.mxu0 0.0
    %92 = vmatpush.msra.mxu0 0.0
    %93 = vmatpush.msra.mxu0 0.0
    %94 = vmatpush.msra.mxu0 0.0
    %95 = vmatpush.msra.mxu0 0.0
    %96 = vmatpush.msra.mxu0 0.0
    %97 = vmatpush.msra.mxu0 %v73
    %98 = vmatpush.msra.mxu0 %v72
    %99 = vmatpush.msra.mxu0 %v71
    %100 = vmatpush.msra.mxu0 %v70
    %101 = vmatmul.f32.gmra.mxu0 %v80
    %v102 = vpop.f32.mrf.mxu0
    %v103 = vadd.f32 %v76, %v102
    %104 = vmatmul.f32.gmra.mxu0 %v83
    %v105 = vpop.f32.mrf.mxu0
    %v106 = vadd.f32 %v76, %v105
    %107 = vdwg.mxu0
    %v108 = vlaneseq
    %v109 = vand.u32 %v108, 127
    %vm110 = vcmp.ge.s32.totalorder %v109, 0
    %vm111 = vcmp.lt.s32.totalorder %v109, 8
    %vm112 = vmand %vm110, %vm111
    %v113 = vsel %vm112, 1, 0
    %v114 = vcvt.s32.f32 %v113
    %vm115 = vcmp.ge.s32.totalorder %v109, 8
    %vm116 = vcmp.lt.s32.totalorder %v109, 16
    %vm117 = vmand %vm115, %vm116
    %v118 = vsel %vm117, 1, 0
    %v119 = vcvt.s32.f32 %v118
    %vm120 = vcmp.ge.s32.totalorder %v109, 16
    %vm121 = vcmp.lt.s32.totalorder %v109, 24
    %vm122 = vmand %vm120, %vm121
    %v123 = vsel %vm122, 1, 0
    %v124 = vcvt.s32.f32 %v123
    %vm125 = vcmp.ge.s32.totalorder %v109, 24
    %vm126 = vcmp.lt.s32.totalorder %v109, 32
    %vm127 = vmand %vm125, %vm126
    %v128 = vsel %vm127, 1, 0
    %v129 = vcvt.s32.f32 %v128
    %v130 = vmul.f32 %v103, %v114
    %132 = vrot.lane.b32.xlu0 %v103, 96
    %v133 = vpop.permute.xlu0 %132
    %v135 = vsel %vm78, %v130, 0
    %v137 = vsel %vm78, %v133, 0
    %139 = vmatpush.xpose.msra.mxu0 0.0
    %140 = vmatpush.xpose.msra.mxu0 0.0
    %141 = vmatpush.xpose.msra.mxu0 0.0
    %142 = vmatpush.xpose.msra.mxu0 0.0
    %143 = vmatpush.xpose.msra.mxu0 0.0
    %144 = vmatpush.xpose.msra.mxu0 0.0
    %145 = vmatpush.xpose.msra.mxu0 0.0
    %146 = vmatpush.xpose.msra.mxu0 0.0
    %147 = vmatpush.xpose.msra.mxu0 0.0
    %148 = vmatpush.xpose.msra.mxu0 0.0
    %149 = vmatpush.xpose.msra.mxu0 0.0
    %150 = vmatpush.xpose.msra.mxu0 0.0
    %151 = vmatpush.xpose.msra.mxu0 0.0
    %152 = vmatpush.xpose.msra.mxu0 0.0
    %153 = vmatpush.xpose.msra.mxu0 0.0
    %154 = vmatpush.xpose.msra.mxu0 %v137
    %155 = vmatmul.f32.gmra.mxu0 %v135
    %v156 = vpop.f32.mrf.mxu0
    %v157 = vadd.f32 0.0, %v156
    %158 = vdwg.mxu0
    %v159 = vmul.f32 %v157, 0.35355338
    %vm160 = vcmask 64512
    %v161 = vsel %vm160, %v159, -inf
    %162 = vmax.xlane.f32.xlu0 %v161
    %v163 = vpop.xlane.xlu0 %162
    %v164 = vsub.f32 %v159, %v163
    %v165 = vmul.f32 %v164, 1.442695
    %v166 = vpow.pop %v165
    %v167 = vsel %vm160, %v166, 0.0
    %168 = vadd.xlane.f32.xlu0 %v167
    %v169 = vpop.xlane.xlu0 %168
    %v170 = vrcp.pop %v169
    %v171 = vmul.f32 %v166, %v170
    %173 = vrot.lane.b32.xlu0 %v114, 64
    %v174 = vpop.permute.xlu0 %173
    %v176 = vmul.f32 %v103, %v174
    %v177 = vmul.f32 %v103, %v119
    %v179 = vsel %vm78, %v177, 0
    %181 = vmatpush.xpose.msra.mxu0 0.0
    %182 = vmatpush.xpose.msra.mxu0 0.0
    %183 = vmatpush.xpose.msra.mxu0 0.0
    %184 = vmatpush.xpose.msra.mxu0 0.0
    %185 = vmatpush.xpose.msra.mxu0 0.0
    %186 = vmatpush.xpose.msra.mxu0 0.0
    %187 = vmatpush.xpose.msra.mxu0 0.0
    %188 = vmatpush.xpose.msra.mxu0 0.0
    %189 = vmatpush.xpose.msra.mxu0 0.0
    %190 = vmatpush.xpose.msra.mxu0 0.0
    %191 = vmatpush.xpose.msra.mxu0 0.0
    %192 = vmatpush.xpose.msra.mxu0 0.0
    %193 = vmatpush.xpose.msra.mxu0 0.0
    %194 = vmatpush.xpose.msra.mxu0 0.0
    %195 = vmatpush.xpose.msra.mxu0 0.0
    %196 = vmatpush.xpose.msra.mxu0 %v137
    %197 = vmatmul.f32.gmra.mxu0 %v179
    %v198 = vpop.f32.mrf.mxu0
    %v199 = vadd.f32 0.0, %v198
    %200 = vdwg.mxu0
    %v201 = vmul.f32 %v199, 0.35355338
    %v202 = vsel %vm160, %v201, -inf
    %203 = vmax.xlane.f32.xlu0 %v202
    %v204 = vpop.xlane.xlu0 %203
    %v205 = vsub.f32 %v201, %v204
    %v206 = vmul.f32 %v205, 1.442695
    %v207 = vpow.pop %v206
    %v208 = vsel %vm160, %v207, 0.0
    %209 = vadd.xlane.f32.xlu0 %v208
    %v210 = vpop.xlane.xlu0 %209
    %v211 = vrcp.pop %v210
    %v212 = vmul.f32 %v207, %v211
    %214 = vrot.lane.b32.xlu0 %v119, 64
    %v215 = vpop.permute.xlu0 %214
    %v217 = vmul.f32 %v103, %v215
    %219 = vrot.lane.b32.xlu0 %v217, 64
    %v220 = vpop.permute.xlu0 %219
    %v223 = vsel %vm160, %v212, 0
    %225 = vmatpush.msra.mxu0 0.0
    %226 = vmatpush.msra.mxu0 0.0
    %227 = vmatpush.msra.mxu0 0.0
    %228 = vmatpush.msra.mxu0 0.0
    %229 = vmatpush.msra.mxu0 0.0
    %230 = vmatpush.msra.mxu0 0.0
    %231 = vmatpush.msra.mxu0 0.0
    %232 = vmatpush.msra.mxu0 0.0
    %233 = vmatpush.msra.mxu0 0.0
    %234 = vmatpush.msra.mxu0 0.0
    %235 = vmatpush.msra.mxu0 0.0
    %236 = vmatpush.msra.mxu0 0.0
    %237 = vmatpush.msra.mxu0 0.0
    %238 = vmatpush.msra.mxu0 0.0
    %239 = vmatpush.msra.mxu0 0.0
    %240 = vmatpush.msra.mxu0 %v220
    %241 = vmatmul.f32.gmra.mxu0 %v223
    %v242 = vpop.f32.mrf.mxu0
    %v243 = vadd.f32 0.0, %v242
    %244 = vdwg.mxu0
    %246 = vrot.lane.b32.xlu0 %v176, 64
    %v247 = vpop.permute.xlu0 %246
    %v250 = vsel %vm160, %v171, 0
    %252 = vmatpush.msra.mxu0 0.0
    %253 = vmatpush.msra.mxu0 0.0
    %254 = vmatpush.msra.mxu0 0.0
    %255 = vmatpush.msra.mxu0 0.0
    %256 = vmatpush.msra.mxu0 0.0
    %257 = vmatpush.msra.mxu0 0.0
    %258 = vmatpush.msra.mxu0 0.0
    %259 = vmatpush.msra.mxu0 0.0
    %260 = vmatpush.msra.mxu0 0.0
    %261 = vmatpush.msra.mxu0 0.0
    %262 = vmatpush.msra.mxu0 0.0
    %263 = vmatpush.msra.mxu0 0.0
    %264 = vmatpush.msra.mxu0 0.0
    %265 = vmatpush.msra.mxu0 0.0
    %266 = vmatpush.msra.mxu0 0.0
    %267 = vmatpush.msra.mxu0 %v247
    %268 = vmatmul.f32.gmra.mxu0 %v250
    %v269 = vpop.f32.mrf.mxu0
    %v270 = vadd.f32 %v243, %v269
    %271 = vdwg.mxu0
    %v272 = vmul.f32 %v103, %v124
    %v274 = vsel %vm78, %v272, 0
    %276 = vmatpush.xpose.msra.mxu0 0.0
    %277 = vmatpush.xpose.msra.mxu0 0.0
    %278 = vmatpush.xpose.msra.mxu0 0.0
    %279 = vmatpush.xpose.msra.mxu0 0.0
    %280 = vmatpush.xpose.msra.mxu0 0.0
    %281 = vmatpush.xpose.msra.mxu0 0.0
    %282 = vmatpush.xpose.msra.mxu0 0.0
    %283 = vmatpush.xpose.msra.mxu0 0.0
    %284 = vmatpush.xpose.msra.mxu0 0.0
    %285 = vmatpush.xpose.msra.mxu0 0.0
    %286 = vmatpush.xpose.msra.mxu0 0.0
    %287 = vmatpush.xpose.msra.mxu0 0.0
    %288 = vmatpush.xpose.msra.mxu0 0.0
    %289 = vmatpush.xpose.msra.mxu0 0.0
    %290 = vmatpush.xpose.msra.mxu0 0.0
    %291 = vmatpush.xpose.msra.mxu0 %v137
    %292 = vmatmul.f32.gmra.mxu0 %v274
    %v293 = vpop.f32.mrf.mxu0
    %v294 = vadd.f32 0.0, %v293
    %295 = vdwg.mxu0
    %v296 = vmul.f32 %v294, 0.35355338
    %v297 = vsel %vm160, %v296, -inf
    %298 = vmax.xlane.f32.xlu0 %v297
    %v299 = vpop.xlane.xlu0 %298
    %v300 = vsub.f32 %v296, %v299
    %v301 = vmul.f32 %v300, 1.442695
    %v302 = vpow.pop %v301
    %v303 = vsel %vm160, %v302, 0.0
    %304 = vadd.xlane.f32.xlu0 %v303
    %v305 = vpop.xlane.xlu0 %304
    %v306 = vrcp.pop %v305
    %v307 = vmul.f32 %v302, %v306
    %309 = vrot.lane.b32.xlu0 %v124, 64
    %v310 = vpop.permute.xlu0 %309
    %v312 = vmul.f32 %v103, %v310
    %314 = vrot.lane.b32.xlu0 %v312, 64
    %v315 = vpop.permute.xlu0 %314
    %v318 = vsel %vm160, %v307, 0
    %320 = vmatpush.msra.mxu0 0.0
    %321 = vmatpush.msra.mxu0 0.0
    %322 = vmatpush.msra.mxu0 0.0
    %323 = vmatpush.msra.mxu0 0.0
    %324 = vmatpush.msra.mxu0 0.0
    %325 = vmatpush.msra.mxu0 0.0
    %326 = vmatpush.msra.mxu0 0.0
    %327 = vmatpush.msra.mxu0 0.0
    %328 = vmatpush.msra.mxu0 0.0
    %329 = vmatpush.msra.mxu0 0.0
    %330 = vmatpush.msra.mxu0 0.0
    %331 = vmatpush.msra.mxu0 0.0
    %332 = vmatpush.msra.mxu0 0.0
    %333 = vmatpush.msra.mxu0 0.0
    %334 = vmatpush.msra.mxu0 0.0
    %335 = vmatpush.msra.mxu0 %v315
    %336 = vmatmul.f32.gmra.mxu0 %v318
    %v337 = vpop.f32.mrf.mxu0
    %v338 = vadd.f32 0.0, %v337
    %339 = vdwg.mxu0
    %v340 = vadd.f32 %v270, %v338
    %v341 = vmul.f32 %v103, %v129
    %v343 = vsel %vm78, %v341, 0
    %345 = vmatpush.xpose.msra.mxu0 0.0
    %346 = vmatpush.xpose.msra.mxu0 0.0
    %347 = vmatpush.xpose.msra.mxu0 0.0
    %348 = vmatpush.xpose.msra.mxu0 0.0
    %349 = vmatpush.xpose.msra.mxu0 0.0
    %350 = vmatpush.xpose.msra.mxu0 0.0
    %351 = vmatpush.xpose.msra.mxu0 0.0
    %352 = vmatpush.xpose.msra.mxu0 0.0
    %353 = vmatpush.xpose.msra.mxu0 0.0
    %354 = vmatpush.xpose.msra.mxu0 0.0
    %355 = vmatpush.xpose.msra.mxu0 0.0
    %356 = vmatpush.xpose.msra.mxu0 0.0
    %357 = vmatpush.xpose.msra.mxu0 0.0
    %358 = vmatpush.xpose.msra.mxu0 0.0
    %359 = vmatpush.xpose.msra.mxu0 0.0
    %360 = vmatpush.xpose.msra.mxu0 %v137
    %361 = vmatmul.f32.gmra.mxu0 %v343
    %v362 = vpop.f32.mrf.mxu0
    %v363 = vadd.f32 0.0, %v362
    %364 = vdwg.mxu0
    %v365 = vmul.f32 %v363, 0.35355338
    %v366 = vsel %vm160, %v365, -inf
    %367 = vmax.xlane.f32.xlu0 %v366
    %v368 = vpop.xlane.xlu0 %367
    %v369 = vsub.f32 %v365, %v368
    %v370 = vmul.f32 %v369, 1.442695
    %v371 = vpow.pop %v370
    %v372 = vsel %vm160, %v371, 0.0
    %373 = vadd.xlane.f32.xlu0 %v372
    %v374 = vpop.xlane.xlu0 %373
    %v375 = vrcp.pop %v374
    %v376 = vmul.f32 %v371, %v375
    %378 = vrot.lane.b32.xlu0 %v129, 64
    %v379 = vpop.permute.xlu0 %378
    %v381 = vmul.f32 %v103, %v379
    %383 = vrot.lane.b32.xlu0 %v381, 64
    %v384 = vpop.permute.xlu0 %383
    %v387 = vsel %vm160, %v376, 0
    %389 = vmatpush.msra.mxu0 0.0
    %390 = vmatpush.msra.mxu0 0.0
    %391 = vmatpush.msra.mxu0 0.0
    %392 = vmatpush.msra.mxu0 0.0
    %393 = vmatpush.msra.mxu0 0.0
    %394 = vmatpush.msra.mxu0 0.0
    %395 = vmatpush.msra.mxu0 0.0
    %396 = vmatpush.msra.mxu0 0.0
    %397 = vmatpush.msra.mxu0 0.0
    %398 = vmatpush.msra.mxu0 0.0
    %399 = vmatpush.msra.mxu0 0.0
    %400 = vmatpush.msra.mxu0 0.0
    %401 = vmatpush.msra.mxu0 0.0
    %402 = vmatpush.msra.mxu0 0.0
    %403 = vmatpush.msra.mxu0 0.0
    %404 = vmatpush.msra.mxu0 %v384
    %405 = vmatmul.f32.gmra.mxu0 %v387
    %v406 = vpop.f32.mrf.mxu0
    %v407 = vadd.f32 0.0, %v406
    %408 = vdwg.mxu0
    %v409 = vadd.f32 %v340, %v407
    %v410 = vmul.f32 %v106, %v114
    %412 = vrot.lane.b32.xlu0 %v106, 96
    %v413 = vpop.permute.xlu0 %412
    %v415 = vsel %vm78, %v410, 0
    %v417 = vsel %vm78, %v413, 0
    %419 = vmatpush.xpose.msra.mxu0 0.0
    %420 = vmatpush.xpose.msra.mxu0 0.0
    %421 = vmatpush.xpose.msra.mxu0 0.0
    %422 = vmatpush.xpose.msra.mxu0 0.0
    %423 = vmatpush.xpose.msra.mxu0 0.0
    %424 = vmatpush.xpose.msra.mxu0 0.0
    %425 = vmatpush.xpose.msra.mxu0 0.0
    %426 = vmatpush.xpose.msra.mxu0 0.0
    %427 = vmatpush.xpose.msra.mxu0 0.0
    %428 = vmatpush.xpose.msra.mxu0 0.0
    %429 = vmatpush.xpose.msra.mxu0 0.0
    %430 = vmatpush.xpose.msra.mxu0 0.0
    %431 = vmatpush.xpose.msra.mxu0 0.0
    %432 = vmatpush.xpose.msra.mxu0 0.0
    %433 = vmatpush.xpose.msra.mxu0 0.0
    %434 = vmatpush.xpose.msra.mxu0 %v417
    %435 = vmatmul.f32.gmra.mxu0 %v415
    %v436 = vpop.f32.mrf.mxu0
    %v437 = vadd.f32 0.0, %v436
    %438 = vdwg.mxu0
    %v439 = vmul.f32 %v437, 0.35355338
    %v440 = vsel %vm160, %v439, -inf
    %441 = vmax.xlane.f32.xlu0 %v440
    %v442 = vpop.xlane.xlu0 %441
    %v443 = vsub.f32 %v439, %v442
    %v444 = vmul.f32 %v443, 1.442695
    %v445 = vpow.pop %v444
    %v446 = vsel %vm160, %v445, 0.0
    %447 = vadd.xlane.f32.xlu0 %v446
    %v448 = vpop.xlane.xlu0 %447
    %v449 = vrcp.pop %v448
    %v450 = vmul.f32 %v445, %v449
    %v451 = vmul.f32 %v106, %v174
    %v452 = vmul.f32 %v106, %v119
    %v454 = vsel %vm78, %v452, 0
    %456 = vmatpush.xpose.msra.mxu0 0.0
    %457 = vmatpush.xpose.msra.mxu0 0.0
    %458 = vmatpush.xpose.msra.mxu0 0.0
    %459 = vmatpush.xpose.msra.mxu0 0.0
    %460 = vmatpush.xpose.msra.mxu0 0.0
    %461 = vmatpush.xpose.msra.mxu0 0.0
    %462 = vmatpush.xpose.msra.mxu0 0.0
    %463 = vmatpush.xpose.msra.mxu0 0.0
    %464 = vmatpush.xpose.msra.mxu0 0.0
    %465 = vmatpush.xpose.msra.mxu0 0.0
    %466 = vmatpush.xpose.msra.mxu0 0.0
    %467 = vmatpush.xpose.msra.mxu0 0.0
    %468 = vmatpush.xpose.msra.mxu0 0.0
    %469 = vmatpush.xpose.msra.mxu0 0.0
    %470 = vmatpush.xpose.msra.mxu0 0.0
    %471 = vmatpush.xpose.msra.mxu0 %v417
    %472 = vmatmul.f32.gmra.mxu0 %v454
    %v473 = vpop.f32.mrf.mxu0
    %v474 = vadd.f32 0.0, %v473
    %475 = vdwg.mxu0
    %v476 = vmul.f32 %v474, 0.35355338
    %v477 = vsel %vm160, %v476, -inf
    %478 = vmax.xlane.f32.xlu0 %v477
    %v479 = vpop.xlane.xlu0 %478
    %v480 = vsub.f32 %v476, %v479
    %v481 = vmul.f32 %v480, 1.442695
    %v482 = vpow.pop %v481
    %v483 = vsel %vm160, %v482, 0.0
    %484 = vadd.xlane.f32.xlu0 %v483
    %v485 = vpop.xlane.xlu0 %484
    %v486 = vrcp.pop %v485
    %v487 = vmul.f32 %v482, %v486
    %v488 = vmul.f32 %v106, %v215
    %490 = vrot.lane.b32.xlu0 %v488, 64
    %v491 = vpop.permute.xlu0 %490
    %v494 = vsel %vm160, %v487, 0
    %496 = vmatpush.msra.mxu0 0.0
    %497 = vmatpush.msra.mxu0 0.0
    %498 = vmatpush.msra.mxu0 0.0
    %499 = vmatpush.msra.mxu0 0.0
    %500 = vmatpush.msra.mxu0 0.0
    %501 = vmatpush.msra.mxu0 0.0
    %502 = vmatpush.msra.mxu0 0.0
    %503 = vmatpush.msra.mxu0 0.0
    %504 = vmatpush.msra.mxu0 0.0
    %505 = vmatpush.msra.mxu0 0.0
    %506 = vmatpush.msra.mxu0 0.0
    %507 = vmatpush.msra.mxu0 0.0
    %508 = vmatpush.msra.mxu0 0.0
    %509 = vmatpush.msra.mxu0 0.0
    %510 = vmatpush.msra.mxu0 0.0
    %511 = vmatpush.msra.mxu0 %v491
    %512 = vmatmul.f32.gmra.mxu0 %v494
    %v513 = vpop.f32.mrf.mxu0
    %v514 = vadd.f32 0.0, %v513
    %515 = vdwg.mxu0
    %517 = vrot.lane.b32.xlu0 %v451, 64
    %v518 = vpop.permute.xlu0 %517
    %v521 = vsel %vm160, %v450, 0
    %523 = vmatpush.msra.mxu0 0.0
    %524 = vmatpush.msra.mxu0 0.0
    %525 = vmatpush.msra.mxu0 0.0
    %526 = vmatpush.msra.mxu0 0.0
    %527 = vmatpush.msra.mxu0 0.0
    %528 = vmatpush.msra.mxu0 0.0
    %529 = vmatpush.msra.mxu0 0.0
    %530 = vmatpush.msra.mxu0 0.0
    %531 = vmatpush.msra.mxu0 0.0
    %532 = vmatpush.msra.mxu0 0.0
    %533 = vmatpush.msra.mxu0 0.0
    %534 = vmatpush.msra.mxu0 0.0
    %535 = vmatpush.msra.mxu0 0.0
    %536 = vmatpush.msra.mxu0 0.0
    %537 = vmatpush.msra.mxu0 0.0
    %538 = vmatpush.msra.mxu0 %v518
    %539 = vmatmul.f32.gmra.mxu0 %v521
    %v540 = vpop.f32.mrf.mxu0
    %v541 = vadd.f32 %v514, %v540
    %542 = vdwg.mxu0
    %v543 = vmul.f32 %v106, %v124
    %v545 = vsel %vm78, %v543, 0
    %547 = vmatpush.xpose.msra.mxu0 0.0
    %548 = vmatpush.xpose.msra.mxu0 0.0
    %549 = vmatpush.xpose.msra.mxu0 0.0
    %550 = vmatpush.xpose.msra.mxu0 0.0
    %551 = vmatpush.xpose.msra.mxu0 0.0
    %552 = vmatpush.xpose.msra.mxu0 0.0
    %553 = vmatpush.xpose.msra.mxu0 0.0
    %554 = vmatpush.xpose.msra.mxu0 0.0
    %555 = vmatpush.xpose.msra.mxu0 0.0
    %556 = vmatpush.xpose.msra.mxu0 0.0
    %557 = vmatpush.xpose.msra.mxu0 0.0
    %558 = vmatpush.xpose.msra.mxu0 0.0
    %559 = vmatpush.xpose.msra.mxu0 0.0
    %560 = vmatpush.xpose.msra.mxu0 0.0
    %561 = vmatpush.xpose.msra.mxu0 0.0
    %562 = vmatpush.xpose.msra.mxu0 %v417
    %563 = vmatmul.f32.gmra.mxu0 %v545
    %v564 = vpop.f32.mrf.mxu0
    %v565 = vadd.f32 0.0, %v564
    %566 = vdwg.mxu0
    %v567 = vmul.f32 %v565, 0.35355338
    %v568 = vsel %vm160, %v567, -inf
    %569 = vmax.xlane.f32.xlu0 %v568
    %v570 = vpop.xlane.xlu0 %569
    %v571 = vsub.f32 %v567, %v570
    %v572 = vmul.f32 %v571, 1.442695
    %v573 = vpow.pop %v572
    %v574 = vsel %vm160, %v573, 0.0
    %575 = vadd.xlane.f32.xlu0 %v574
    %v576 = vpop.xlane.xlu0 %575
    %v577 = vrcp.pop %v576
    %v578 = vmul.f32 %v573, %v577
    %v579 = vmul.f32 %v106, %v310
    %581 = vrot.lane.b32.xlu0 %v579, 64
    %v582 = vpop.permute.xlu0 %581
    %v585 = vsel %vm160, %v578, 0
    %587 = vmatpush.msra.mxu0 0.0
    %588 = vmatpush.msra.mxu0 0.0
    %589 = vmatpush.msra.mxu0 0.0
    %590 = vmatpush.msra.mxu0 0.0
    %591 = vmatpush.msra.mxu0 0.0
    %592 = vmatpush.msra.mxu0 0.0
    %593 = vmatpush.msra.mxu0 0.0
    %594 = vmatpush.msra.mxu0 0.0
    %595 = vmatpush.msra.mxu0 0.0
    %596 = vmatpush.msra.mxu0 0.0
    %597 = vmatpush.msra.mxu0 0.0
    %598 = vmatpush.msra.mxu0 0.0
    %599 = vmatpush.msra.mxu0 0.0
    %600 = vmatpush.msra.mxu0 0.0
    %601 = vmatpush.msra.mxu0 0.0
    %602 = vmatpush.msra.mxu0 %v582
    %603 = vmatmul.f32.gmra.mxu0 %v585
    %v604 = vpop.f32.mrf.mxu0
    %v605 = vadd.f32 0.0, %v604
    %606 = vdwg.mxu0
    %v607 = vadd.f32 %v541, %v605
    %v608 = vmul.f32 %v106, %v129
    %v610 = vsel %vm78, %v608, 0
    %612 = vmatpush.xpose.msra.mxu0 0.0
    %613 = vmatpush.xpose.msra.mxu0 0.0
    %614 = vmatpush.xpose.msra.mxu0 0.0
    %615 = vmatpush.xpose.msra.mxu0 0.0
    %616 = vmatpush.xpose.msra.mxu0 0.0
    %617 = vmatpush.xpose.msra.mxu0 0.0
    %618 = vmatpush.xpose.msra.mxu0 0.0
    %619 = vmatpush.xpose.msra.mxu0 0.0
    %620 = vmatpush.xpose.msra.mxu0 0.0
    %621 = vmatpush.xpose.msra.mxu0 0.0
    %622 = vmatpush.xpose.msra.mxu0 0.0
    %623 = vmatpush.xpose.msra.mxu0 0.0
    %624 = vmatpush.xpose.msra.mxu0 0.0
    %625 = vmatpush.xpose.msra.mxu0 0.0
    %626 = vmatpush.xpose.msra.mxu0 0.0
    %627 = vmatpush.xpose.msra.mxu0 %v417
    %628 = vmatmul.f32.gmra.mxu0 %v610
    %v629 = vpop.f32.mrf.mxu0
    %v630 = vadd.f32 0.0, %v629
    %631 = vdwg.mxu0
    %v632 = vmul.f32 %v630, 0.35355338
    %v633 = vsel %vm160, %v632, -inf
    %634 = vmax.xlane.f32.xlu0 %v633
    %v635 = vpop.xlane.xlu0 %634
    %v636 = vsub.f32 %v632, %v635
    %v637 = vmul.f32 %v636, 1.442695
    %v638 = vpow.pop %v637
    %v639 = vsel %vm160, %v638, 0.0
    %640 = vadd.xlane.f32.xlu0 %v639
    %v641 = vpop.xlane.xlu0 %640
    %v642 = vrcp.pop %v641
    %v643 = vmul.f32 %v638, %v642
    %v644 = vmul.f32 %v106, %v379
    %646 = vrot.lane.b32.xlu0 %v644, 64
    %v647 = vpop.permute.xlu0 %646
    %v650 = vsel %vm160, %v643, 0
    %652 = vmatpush.msra.mxu0 0.0
    %653 = vmatpush.msra.mxu0 0.0
    %654 = vmatpush.msra.mxu0 0.0
    %655 = vmatpush.msra.mxu0 0.0
    %656 = vmatpush.msra.mxu0 0.0
    %657 = vmatpush.msra.mxu0 0.0
    %658 = vmatpush.msra.mxu0 0.0
    %659 = vmatpush.msra.mxu0 0.0
    %660 = vmatpush.msra.mxu0 0.0
    %661 = vmatpush.msra.mxu0 0.0
    %662 = vmatpush.msra.mxu0 0.0
    %663 = vmatpush.msra.mxu0 0.0
    %664 = vmatpush.msra.mxu0 0.0
    %665 = vmatpush.msra.mxu0 0.0
    %666 = vmatpush.msra.mxu0 0.0
    %667 = vmatpush.msra.mxu0 %v647
    %668 = vmatmul.f32.gmra.mxu0 %v650
    %v669 = vpop.f32.mrf.mxu0
    %v670 = vadd.f32 0.0, %v669
    %671 = vdwg.mxu0
    %v672 = vadd.f32 %v607, %v670
    %v673 = vld [vmem:[#allocation7] sm:$0xff]
    %v674 = vld [vmem:[#allocation7 + $0x8] sm:$0xff]
    %v675 = vld [vmem:[#allocation7 + $0x10] sm:$0xff]
    %v676 = vld [vmem:[#allocation7 + $0x18] sm:$0xff]
    %v677 = vld [vmem:[%s4] sm:$0x1]
    %v679 = vperm.slane %v677, 0
    %v682 = vsel %vm78, %v409, 0
    %v685 = vsel %vm78, %v672, 0
    %687 = vmatpush.msra.mxu0 0.0
    %688 = vmatpush.msra.mxu0 0.0
    %689 = vmatpush.msra.mxu0 0.0
    %690 = vmatpush.msra.mxu0 0.0
    %691 = vmatpush.msra.mxu0 0.0
    %692 = vmatpush.msra.mxu0 0.0
    %693 = vmatpush.msra.mxu0 0.0
    %694 = vmatpush.msra.mxu0 0.0
    %695 = vmatpush.msra.mxu0 0.0
    %696 = vmatpush.msra.mxu0 0.0
    %697 = vmatpush.msra.mxu0 0.0
    %698 = vmatpush.msra.mxu0 0.0
    %699 = vmatpush.msra.mxu0 %v676
    %700 = vmatpush.msra.mxu0 %v675
    %701 = vmatpush.msra.mxu0 %v674
    %702 = vmatpush.msra.mxu0 %v673
    %703 = vmatmul.f32.gmra.mxu0 %v682
    %v704 = vpop.f32.mrf.mxu0
    %v705 = vadd.f32 %v679, %v704
    %706 = vmatmul.f32.gmra.mxu0 %v685
    %v707 = vpop.f32.mrf.mxu0
    %v708 = vadd.f32 %v679, %v707
    %709 = vdwg.mxu0
    %710 = vst.msk [vmem:[#allocation8] sm:$0xff] %vm78, %v705
    %711 = vst.msk [vmem:[#allocation8 + $0x8] sm:$0xff] %vm78, %v708
    // Predicated region
    $region34: #{tpu_custom_call.1} parent=1 // pred_check
      _
    $region35: #{tpu_custom_call.1} parent=1 // pred_check_branch
      %713 = sbr.rel (0) target = $region37
    $region36: #{tpu_custom_call.1} parent=1 // pred_region
      %715 = vsyncadd [#allocation4], 0
      %s716 = sshll.u32 [#allocation8], 4
      %s717 = int_to_ptr.vmem [resolvable:$true] %s716
      %s718 = sshll.u32 %s5, 4
      %s719 = int_to_ptr.hbm [resolvable:$true] %s718
      %724 = dma.vmem_to_hbm [thread:$0]  %s717, 256, %s719, [#allocation4], 128, 128, 8
    $region37: #{tpu_custom_call.1} parent=1 // pred_fallthru
      _
    // Predicated region
    $region38: #{tpu_custom_call.1} parent=1 // pred_check
      _
    $region39: #{tpu_custom_call.1} parent=1 // pred_check_branch
      %726 = sbr.rel (0) target = $region41
    $region40: #{tpu_custom_call.1} parent=1 // pred_region
      %728 = dma.done [#allocation4], 256
    $region41: #{tpu_custom_call.1} parent=1 // pred_fallthru
      _
    %729 = vsyncpa [#allocation3], 1
    %730 = vsyncpa [#allocation6], 1
    %731 = vsyncpa [#allocation4], 1

</llo_original>
